<compile_context>
chip_gen: v7x
topology: tpu7x:2x2x1
jax: 0.10.0
libtpu: 0.0.40
codegen_flags: <defaults>
</compile_context>

<pallas_src>
import jax
import jax.numpy as jnp
from jax.experimental import pallas as pl
from jax.experimental.pallas import tpu as pltpu

NUM_CLASSES = 10
HIDDEN = 10

# Fused-head row layout (padded to a multiple of 8 sublanes):
#   rows 0:10 = aux head, rows 10:20 = mi head, row 20 = gan head, rows 21:24 = 0
_HEAD_ROWS = 24
_GAN_ROW = 20

# Packed-parameter slab layout (rows x cols), float32, shape (64, 16):
#   rows  0:10  col  0    = W1 (10,1)          col 1  = b1 (10,1)
#   rows 16:26  cols 0:10 = W2 (10,10)         col 10 = b2 (10,1)
#   rows 32:56  cols 0:10 = W_fused (24,10)    col 10 = b_fused (24,1)
_ROW_W1, _ROW_W2, _ROW_WF = 0, 16, 32
_P_ROWS, _P_COLS = 64, 16

# Lane cap per grid step: ~1.4 MB of output per step (well above the ~0.35 us
# per-step pipeline overhead) while staying comfortably inside v5e's VMEM.
_TB_CAP = 16384


def _d_gaussian_kernel(x_ref, p_ref, s_ref, c_ref, mi_ref):
    x = x_ref[...]                                           # (1, tb)  batch on lanes

    w1 = p_ref[_ROW_W1:_ROW_W1 + HIDDEN, 0:1]                # (10, 1)
    b1 = p_ref[_ROW_W1:_ROW_W1 + HIDDEN, 1:2]                # (10, 1)
    w2 = p_ref[_ROW_W2:_ROW_W2 + HIDDEN, 0:HIDDEN]           # (10, 10)
    b2 = p_ref[_ROW_W2:_ROW_W2 + HIDDEN, HIDDEN:HIDDEN + 1]  # (10, 1)
    wf = p_ref[_ROW_WF:_ROW_WF + _HEAD_ROWS, 0:HIDDEN]       # (24, 10) fused [aux;mi;gan;pad]
    bf = p_ref[_ROW_WF:_ROW_WF + _HEAD_ROWS, HIDDEN:HIDDEN + 1]

    # layer 1 has K=1: rank-1 outer product on the VPU (broadcast FMA), no MXU.
    h = jnp.tanh(w1 * x + b1)                                                  # (10, tb)
    h = jnp.tanh(jnp.dot(w2, h, preferred_element_type=jnp.float32) + b2)      # (10, tb)

    # single fused head matmul (W3 already folded in at pack time).
    out = jnp.dot(wf, h, preferred_element_type=jnp.float32) + bf              # (24, tb)

    # sigmoid on the single gan row only (1 EUP row instead of 21 + select).
    s_ref[...] = jax.nn.sigmoid(out[_GAN_ROW:_GAN_ROW + 1, :])                 # (1, tb)

    # One in-kernel transpose (XLU) so c / mi are stored directly in (B, C)
    # layout -> no wrapper-side transpose / extra HBM pass over the output.
    t = out.T                                                                  # (tb, 24)
    c_ref[...] = t[:, 0:NUM_CLASSES]                                           # (tb, 10)
    mi_ref[...] = t[:, NUM_CLASSES:2 * NUM_CLASSES]                            # (tb, 10)


def pack_params(params):
    """Pack weights/biases into one (64,16) f32 slab (call ONCE, reuse across forwards).

    Folds the linear 3rd encoder layer into all three heads (exact algebra):
      feat = h @ W3 + b3 ; head(feat) = feat @ Wx + bx
      => head(h) = h @ (W3 @ Wx) + (b3 @ Wx + bx)
    """
    (w1, b1), (w2, b2), (w3, b3), (wg, bg), (wa, ba), (wm, bm) = params

    w_heads = jnp.concatenate([wa, wm, wg], axis=1)     # (10, 21)  in x [aux|mi|gan]
    b_heads = jnp.concatenate([ba, bm, bg], axis=1)     # (1, 21)
    wf = (w3 @ w_heads).T                               # (21, 10)  (out, in)
    bf = (b3 @ w_heads + b_heads).T                     # (21, 1)

    P = jnp.zeros((_P_ROWS, _P_COLS), jnp.float32)
    P = P.at[_ROW_W1:_ROW_W1 + HIDDEN, 0:1].set(w1.T)
    P = P.at[_ROW_W1:_ROW_W1 + HIDDEN, 1:2].set(b1.T)
    P = P.at[_ROW_W2:_ROW_W2 + HIDDEN, 0:HIDDEN].set(w2.T)
    P = P.at[_ROW_W2:_ROW_W2 + HIDDEN, HIDDEN:HIDDEN + 1].set(b2.T)
    P = P.at[_ROW_WF:_ROW_WF + wf.shape[0], 0:HIDDEN].set(wf)       # rows 21:24 stay zero
    P = P.at[_ROW_WF:_ROW_WF + wf.shape[0], HIDDEN:HIDDEN + 1].set(bf)
    return P


def _num_tensorcores_per_chip():
    # Generation-aware heuristic: only v7x has 2 TensorCores per chip among the
    # targeted generations. Safe fallback to 1 if the query fails.
    try:
        kind = (jax.devices()[0].device_kind or "").lower()
    except Exception:
        return 1
    return 2 if "v7" in kind else 1


def _pick_batch_tile(B):
    Bp0 = pl.cdiv(B, 128) * 128                   # lane-dense rounding
    if _num_tensorcores_per_chip() >= 2 and Bp0 > 128:
        # v7x: guarantee >= 2 grid steps so both TensorCores get work.
        half = pl.cdiv(pl.cdiv(Bp0, 2), 128) * 128
        return min(_TB_CAP, half)
    # single-TC chips (v5e/v6e): grid is a serial loop -> one maximal tile if it fits.
    return min(_TB_CAP, Bp0)


def d_gaussian_forward(x, packed_params, *, tb=None):
    """x: (B, 1) float32, packed_params: (64,16) from pack_params.

    Returns (s: (B,), c: (B, C), mi: (B, C))."""
    assert x.ndim == 2 and x.shape[1] == 1
    B = x.shape[0]

    if tb is None:
        tb = _pick_batch_tile(B)
    assert tb % 128 == 0, "batch tile must be a multiple of 128 (lane-dense)"

    n_steps = pl.cdiv(B, tb)
    Bp = n_steps * tb

    xt = x.reshape(1, B)                          # (B,1) -> (1,B): same data order
    if Bp != B:
        xt = jnp.pad(xt, ((0, 0), (0, Bp - B)))

    s_out, c_out, mi_out = pl.pallas_call(
        _d_gaussian_kernel,
        out_shape=(
            jax.ShapeDtypeStruct((1, Bp), jnp.float32),
            jax.ShapeDtypeStruct((Bp, NUM_CLASSES), jnp.float32),
            jax.ShapeDtypeStruct((Bp, NUM_CLASSES), jnp.float32),
        ),
        grid_spec=pltpu.PrefetchScalarGridSpec(
            num_scalar_prefetch=0,
            grid=(n_steps,),
            in_specs=[
                pl.BlockSpec((1, tb), lambda i: (0, i)),            # x, batch on lanes
                pl.BlockSpec((_P_ROWS, _P_COLS), lambda i: (0, 0)),  # packed params, resident
            ],
            out_specs=[
                pl.BlockSpec((1, tb), lambda i: (0, i)),             # s, lane-dense
                pl.BlockSpec((tb, NUM_CLASSES), lambda i: (i, 0)),   # c, already (B,C) layout
                pl.BlockSpec((tb, NUM_CLASSES), lambda i: (i, 0)),   # mi
            ],
        ),
        compiler_params=pltpu.CompilerParams(
            dimension_semantics=("parallel",),
            vmem_limit_bytes=40 * 1024 * 1024,   # above v5e's 16 MiB default, below v7x's 64 MiB
        ),
    )(xt, packed_params)

    if Bp != B:
        return s_out[0, :B], c_out[:B], mi_out[:B]
    return s_out[0], c_out, mi_out


def init_params(key, num_classes=NUM_CLASSES):
    """PyTorch-default Linear init (U[-1/sqrt(fan_in), 1/sqrt(fan_in)]).

    Weights stored as (in, out); biases as (1, out)."""
    def linear(k, fan_in, fan_out):
        kw, kb = jax.random.split(k)
        bound = 1.0 / jnp.sqrt(jnp.float32(fan_in))
        w = jax.random.uniform(kw, (fan_in, fan_out), jnp.float32, -bound, bound)
        b = jax.random.uniform(kb, (1, fan_out), jnp.float32, -bound, bound)
        return w, b

    ks = jax.random.split(key, 6)
    return (linear(ks[0], 1, HIDDEN), linear(ks[1], HIDDEN, HIDDEN),
            linear(ks[2], HIDDEN, HIDDEN), linear(ks[3], HIDDEN, 1),
            linear(ks[4], HIDDEN, num_classes), linear(ks[5], HIDDEN, num_classes))


def _reference_forward(x, params):
    (w1, b1), (w2, b2), (w3, b3), (wg, bg), (wa, ba), (wm, bm) = params
    h = jnp.tanh(x @ w1 + b1)
    h = jnp.tanh(h @ w2 + b2)
    feat = h @ w3 + b3
    c = feat @ wa + ba
    mi = feat @ wm + bm
    s = jax.nn.sigmoid(feat @ wg + bg)
    return s.squeeze(1), c, mi


if __name__ == "__main__":
    key = jax.random.PRNGKey(0)
    k_params, k_x = jax.random.split(key)
    params = init_params(k_params)
    packed = pack_params(params)          # pack ONCE, outside the jitted forward

    fwd = jax.jit(d_gaussian_forward, static_argnames=("tb",))

    # case 1: small batch (B=16) -> single padded 128-lane tile (default heuristic)
    # case 2: B=512 with tb=256 -> exact 2 grid steps, no padding (multi-step path)
    for B, tb in ((16, None), (512, 256)):
        kx = jax.random.fold_in(k_x, B)
        x = jax.random.normal(kx, (B, 1), dtype=jnp.float32)

        s, c, mi = fwd(x, packed, tb=tb)
        jax.block_until_ready((s, c, mi))

        s_ref, c_ref, mi_ref = _reference_forward(x, params)
        assert s.shape == (B,) and c.shape == (B, NUM_CLASSES) and mi.shape == (B, NUM_CLASSES)
        assert jnp.allclose(s, s_ref, atol=1e-4, rtol=1e-4), float(jnp.max(jnp.abs(s - s_ref)))
        assert jnp.allclose(c, c_ref, atol=1e-4, rtol=1e-4), float(jnp.max(jnp.abs(c - c_ref)))
        assert jnp.allclose(mi, mi_ref, atol=1e-4, rtol=1e-4), float(jnp.max(jnp.abs(mi - mi_ref)))

    print("KERNEL_OK")
</pallas_src>

<mosaic_0001>
module attributes {stable_mosaic.version = 11 : i64} {
  func.func @_d_gaussian_kernel(%arg0: i32, %arg1: memref<1x128xf32, #tpu.memory_space<vmem>>, %arg2: memref<64x16xf32, #tpu.memory_space<vmem>>, %arg3: memref<1x128xf32, #tpu.memory_space<vmem>>, %arg4: memref<128x10xf32, #tpu.memory_space<vmem>>, %arg5: memref<128x10xf32, #tpu.memory_space<vmem>>) attributes {dimension_semantics = [#tpu.dimension_semantics<parallel>], iteration_bounds = array<i64: 1>, scalar_prefetch = 0 : i64, scratch_operands = 0 : i64, tpu.core_type = #tpu.core_type<tc>, window_params = [{transform_indices = @transform_0, window_bounds = array<i64: 1, 128>}, {pipeline_mode = #tpu.pipeline_mode<synchronous>, transform_indices = @transform_1, window_bounds = array<i64: 64, 16>}, {transform_indices = @transform_2, window_bounds = array<i64: 1, 128>}, {transform_indices = @transform_3, window_bounds = array<i64: 128, 10>}, {transform_indices = @transform_4, window_bounds = array<i64: 128, 10>}]} {
    %c0 = arith.constant 0 : index
    %c0_0 = arith.constant 0 : index
    %0 = vector.load %arg1[%c0, %c0_0] : memref<1x128xf32, #tpu.memory_space<vmem>>, vector<1x128xf32>
    %c0_1 = arith.constant 0 : index
    %c0_2 = arith.constant 0 : index
    %1 = vector.load %arg2[%c0_1, %c0_2] : memref<64x16xf32, #tpu.memory_space<vmem>>, vector<10x1xf32>
    %c0_3 = arith.constant 0 : index
    %c1 = arith.constant 1 : index
    %2 = vector.load %arg2[%c0_3, %c1] : memref<64x16xf32, #tpu.memory_space<vmem>>, vector<10x1xf32>
    %c16 = arith.constant 16 : index
    %c0_4 = arith.constant 0 : index
    %3 = vector.load %arg2[%c16, %c0_4] : memref<64x16xf32, #tpu.memory_space<vmem>>, vector<10x10xf32>
    %c16_5 = arith.constant 16 : index
    %c10 = arith.constant 10 : index
    %4 = vector.load %arg2[%c16_5, %c10] : memref<64x16xf32, #tpu.memory_space<vmem>>, vector<10x1xf32>
    %c32 = arith.constant 32 : index
    %c0_6 = arith.constant 0 : index
    %5 = vector.load %arg2[%c32, %c0_6] : memref<64x16xf32, #tpu.memory_space<vmem>>, vector<24x10xf32>
    %c32_7 = arith.constant 32 : index
    %c10_8 = arith.constant 10 : index
    %6 = vector.load %arg2[%c32_7, %c10_8] : memref<64x16xf32, #tpu.memory_space<vmem>>, vector<24x1xf32>
    %7 = vector.broadcast %1 : vector<10x1xf32> to vector<10x128xf32>
    %8 = vector.broadcast %0 : vector<1x128xf32> to vector<10x128xf32>
    %9 = arith.mulf %7, %8 : vector<10x128xf32>
    %10 = vector.broadcast %2 : vector<10x1xf32> to vector<10x128xf32>
    %11 = arith.addf %9, %10 : vector<10x128xf32>
    %12 = math.tanh %11 : vector<10x128xf32>
    %cst = arith.constant dense<0.000000e+00> : vector<10x128xf32>
    %13 = tpu.matmul %3, %12, %cst {dimension_numbers = #tpu.dot_dimension_numbers<[1], [0], [0], [1], [0, 0, 1, 1], [], []>} : vector<10x10xf32>, vector<10x128xf32>, vector<10x128xf32> -> vector<10x128xf32>
    %14 = vector.broadcast %4 : vector<10x1xf32> to vector<10x128xf32>
    %15 = arith.addf %13, %14 : vector<10x128xf32>
    %16 = math.tanh %15 : vector<10x128xf32>
    %cst_9 = arith.constant dense<0.000000e+00> : vector<24x128xf32>
    %17 = tpu.matmul %5, %16, %cst_9 {dimension_numbers = #tpu.dot_dimension_numbers<[1], [0], [0], [1], [0, 0, 1, 1], [], []>} : vector<24x10xf32>, vector<10x128xf32>, vector<24x128xf32> -> vector<24x128xf32>
    %18 = vector.broadcast %6 : vector<24x1xf32> to vector<24x128xf32>
    %19 = arith.addf %17, %18 : vector<24x128xf32>
    %20 = vector.extract_strided_slice %19 {offsets = [20, 0], sizes = [1, 128], strides = [1, 1]} : vector<24x128xf32> to vector<1x128xf32>
    %21 = arith.negf %20 : vector<1x128xf32>
    %22 = math.exp %21 : vector<1x128xf32>
    %cst_10 = arith.constant 1.000000e+00 : f32
    %23 = vector.broadcast %cst_10 : f32 to vector<1x128xf32>
    %24 = arith.addf %23, %22 : vector<1x128xf32>
    %25 = arith.divf %23, %24 : vector<1x128xf32>
    %c0_11 = arith.constant 0 : index
    %c0_12 = arith.constant 0 : index
    %26 = vector.load %arg3[%c0_11, %c0_12] : memref<1x128xf32, #tpu.memory_space<vmem>>, vector<1x128xf32>
    tpu.vector_store %arg3[%c0_11, %c0_12], %25 {strides = array<i32>} : memref<1x128xf32, #tpu.memory_space<vmem>>, vector<1x128xf32>,
    %27 = tpu.transpose %19, [1, 0] : vector<24x128xf32> -> vector<128x24xf32>
    %28 = vector.extract_strided_slice %27 {offsets = [0, 0], sizes = [128, 10], strides = [1, 1]} : vector<128x24xf32> to vector<128x10xf32>
    %c0_13 = arith.constant 0 : index
    %c0_14 = arith.constant 0 : index
    %29 = vector.load %arg4[%c0_13, %c0_14] : memref<128x10xf32, #tpu.memory_space<vmem>>, vector<128x10xf32>
    tpu.vector_store %arg4[%c0_13, %c0_14], %28 {strides = array<i32>} : memref<128x10xf32, #tpu.memory_space<vmem>>, vector<128x10xf32>,
    %30 = vector.extract_strided_slice %27 {offsets = [0, 10], sizes = [128, 10], strides = [1, 1]} : vector<128x24xf32> to vector<128x10xf32>
    %c0_15 = arith.constant 0 : index
    %c0_16 = arith.constant 0 : index
    %31 = vector.load %arg5[%c0_15, %c0_16] : memref<128x10xf32, #tpu.memory_space<vmem>>, vector<128x10xf32>
    tpu.vector_store %arg5[%c0_15, %c0_16], %30 {strides = array<i32>} : memref<128x10xf32, #tpu.memory_space<vmem>>, vector<128x10xf32>,
    return
  }
  func.func @transform_0(%arg0: i32) -> (i32, i32) {
    %c0_i32 = arith.constant 0 : i32
    %c0_i32_0 = arith.constant 0 : i32
    return %c0_i32, %arg0 : i32, i32
  }
  func.func @transform_1(%arg0: i32) -> (i32, i32) {
    %c0_i32 = arith.constant 0 : i32
    %c0_i32_0 = arith.constant 0 : i32
    %c0_i32_1 = arith.constant 0 : i32
    return %c0_i32, %c0_i32_0 : i32, i32
  }
  func.func @transform_2(%arg0: i32) -> (i32, i32) {
    %c0_i32 = arith.constant 0 : i32
    %c0_i32_0 = arith.constant 0 : i32
    return %c0_i32, %arg0 : i32, i32
  }
  func.func @transform_3(%arg0: i32) -> (i32, i32) {
    %c0_i32 = arith.constant 0 : i32
    %c0_i32_0 = arith.constant 0 : i32
    return %arg0, %c0_i32 : i32, i32
  }
  func.func @transform_4(%arg0: i32) -> (i32, i32) {
    %c0_i32 = arith.constant 0 : i32
    %c0_i32_0 = arith.constant 0 : i32
    return %arg0, %c0_i32 : i32, i32
  }
}

</mosaic_0001>

<llo_original>
// kernel: d_gaussian_forward.1
$region0: #{d_gaussian_forward.1}
  #allocation0 [shape = 'u32[]', space=smem, size = 0x4, offset = 0x4, fixed_abs, tag = 'smem constant byte address 0x4 - core index']
  #allocation1 [shape = 'u32[144,128]{1,0:T(1,128)}', space=vmem, size = 0x12000, scoped, tag = 'internal scratch']
  %s0 = inlined_call_operand.vmem [shape: f32[1,128], index: 0, kind: input, shape index: {}]
  %s1 = inlined_call_operand.vmem [shape: f32[64,16], index: 1, kind: input, shape index: {}]
  %s2 = inlined_call_operand.vmem [shape: f32[1,128], index: 2, kind: output, shape index: {0}]
  %s3 = inlined_call_operand.vmem [shape: f32[128,10], index: 3, kind: output, shape index: {1}]
  %s4 = inlined_call_operand.vmem [shape: f32[128,10], index: 4, kind: output, shape index: {2}]
  %5 = xla_tuple %s2, %s3, %s4
  %s6 = sld [smem:[#allocation0]]
  $region34: #{d_gaussian_forward.1} parent=0
    _
  %s8 = ssub.s32 1, %s6
  %s9 = scalar_select 0, %s8, %s6
  // Predicated region
  $region2: #{d_gaussian_forward.1} parent=0 // pred_check
    _
  $region3: #{d_gaussian_forward.1} parent=0 // pred_check_branch
    %11 = sbr.rel (0) target = $region5
  $region4: #{d_gaussian_forward.1} parent=0 // pred_region
    _
  $region5: #{d_gaussian_forward.1} parent=0 // pred_fallthru
    _
  // Predicated region
  $region6: #{d_gaussian_forward.1} parent=0 // pred_check
    _
  $region7: #{d_gaussian_forward.1} parent=0 // pred_check_branch
    %13 = sbr.rel (0) target = $region9
  $region8: #{d_gaussian_forward.1} parent=0 // pred_region
    _
  $region9: #{d_gaussian_forward.1} parent=0 // pred_fallthru
    _
  %v14 = vld [vmem:[%s0] sm:$0x1]
  %v15 = vld [vmem:[%s1] sm:$0xff]
  %v16 = vld [vmem:[%s1 + $0x8] sm:$0x3]
  %v17 = vld [vmem:[%s1 + $0x10] sm:$0xff]
  %v18 = vld [vmem:[%s1 + $0x18] sm:$0x3]
  %v19 = vld [vmem:[%s1 + $0x20] sm:$0xff]
  %v20 = vld [vmem:[%s1 + $0x28] sm:$0xff]
  %v21 = vld [vmem:[%s1 + $0x30] sm:$0xff]
  %23 = vset.pattern.permute.xlu0 0
  %24 = vperm.xlu0 %23, %v15
  %v25 = vpop.permute.xlu0 %24
  %28 = vset.pattern.permute.xlu0 0
  %29 = vperm.xlu0 %28, %v16
  %v30 = vpop.permute.xlu0 %29
  %v33 = vlaneseq
  %v34 = vshrl.u32 %v33, 7
  %v35 = vsub.s32 0, %v34
  %v36 = vrot.slane %v14, %v35
  %v38 = vmul.f32 %v25, %v36
  %v39 = vmul.f32 %v30, %v36
  %40 = vset.pattern.permute.xlu0 1
  %41 = vperm.xlu0 %40, %v15
  %v42 = vpop.permute.xlu0 %41
  %44 = vset.pattern.permute.xlu0 1
  %45 = vperm.xlu0 %44, %v16
  %v46 = vpop.permute.xlu0 %45
  %v48 = vadd.f32 %v38, %v42
  %v49 = vadd.f32 %v39, %v46
  %v50 = vtanh.pop %v48
  %v51 = vtanh.pop %v49
  %53 = vset.pattern.permute.xlu0 10
  %54 = vperm.xlu0 %53, %v17
  %v55 = vpop.permute.xlu0 %54
  %58 = vset.pattern.permute.xlu0 10
  %59 = vperm.xlu0 %58, %v18
  %v60 = vpop.permute.xlu0 %59
  %vm62 = vcmask 80896
  %v63 = vsel %vm62, %v17, 0
  %v65 = vsel %vm62, %v18, 0
  %vm67 = vcmask 1041408
  %v69 = vsel %vm67, %v51, 0
  %71 = vmatprep.subr.mxu0 0.0
  %72 = vmatpush1.msra.mxu0 %v50
  %73 = vmatprep.subr.mxu0 0.0
  %74 = vmatpush1.msra.mxu0 %v69
  %75 = vmatprep.subr.mxu0 0.0
  %76 = vmatpush1.msra.mxu0 0.0
  %77 = vmatprep.subr.mxu0 0.0
  %78 = vmatpush1.msra.mxu0 0.0
  %79 = vmatprep.subr.mxu0 0.0
  %80 = vmatpush1.msra.mxu0 0.0
  %81 = vmatprep.subr.mxu0 0.0
  %82 = vmatpush1.msra.mxu0 0.0
  %83 = vmatprep.subr.mxu0 0.0
  %84 = vmatpush1.msra.mxu0 0.0
  %85 = vmatprep.subr.mxu0 0.0
  %86 = vmatpush1.msra.mxu0 0.0
  %87 = vmatprep.subr.mxu0 0.0
  %88 = vmatpush1.msra.mxu0 0.0
  %89 = vmatprep.subr.mxu0 0.0
  %90 = vmatpush1.msra.mxu0 0.0
  %91 = vmatprep.subr.mxu0 0.0
  %92 = vmatpush1.msra.mxu0 0.0
  %93 = vmatprep.subr.mxu0 0.0
  %94 = vmatpush1.msra.mxu0 0.0
  %95 = vmatprep.subr.mxu0 0.0
  %96 = vmatpush1.msra.mxu0 0.0
  %97 = vmatprep.subr.mxu0 0.0
  %98 = vmatpush1.msra.mxu0 0.0
  %99 = vmatprep.subr.mxu0 0.0
  %100 = vmatpush1.msra.mxu0 0.0
  %101 = vmatprep.subr.mxu0 0.0
  %102 = vmatpush1.msra.mxu0 0.0
  %103 = vmatprep.subr.mxu0 0.0
  %104 = vmatpush1.msra.mxu0 0.0
  %105 = vmatprep.subr.mxu0 0.0
  %106 = vmatpush1.msra.mxu0 0.0
  %107 = vmatprep.subr.mxu0 0.0
  %108 = vmatpush1.msra.mxu0 0.0
  %109 = vmatprep.subr.mxu0 0.0
  %110 = vmatpush1.msra.mxu0 0.0
  %111 = vmatprep.subr.mxu0 0.0
  %112 = vmatpush1.msra.mxu0 0.0
  %113 = vmatprep.subr.mxu0 0.0
  %114 = vmatpush1.msra.mxu0 0.0
  %115 = vmatprep.subr.mxu0 0.0
  %116 = vmatpush1.msra.mxu0 0.0
  %117 = vmatprep.subr.mxu0 0.0
  %118 = vmatpush1.msra.mxu0 0.0
  %119 = vmatprep.subr.mxu0 0.0
  %120 = vmatpush1.msra.mxu0 0.0
  %121 = vmatprep.subr.mxu0 0.0
  %122 = vmatpush1.msra.mxu0 0.0
  %123 = vmatprep.subr.mxu0 0.0
  %124 = vmatpush1.msra.mxu0 0.0
  %125 = vmatprep.subr.mxu0 0.0
  %126 = vmatpush1.msra.mxu0 0.0
  %127 = vmatprep.subr.mxu0 0.0
  %128 = vmatpush1.msra.mxu0 0.0
  %129 = vmatprep.subr.mxu0 0.0
  %130 = vmatpush1.msra.mxu0 0.0
  %131 = vmatprep.subr.mxu0 0.0
  %132 = vmatpush1.msra.mxu0 0.0
  %133 = vmatprep.subr.mxu0 0.0
  %134 = vmatpush1.msra.mxu0 0.0
  %135 = vmatprep.mubr.f32.mxu0 0.0
  %136 = vmatmul.mubr.f32.gmra.mrb[0].mxu0 %v63
  %v137 = vpop.f32.mrb[0].mxu0
  %v138 = vadd.f32 %v55, %v137
  %v139 = vpop.f32.mrb[0].mxu0
  %140 = vmatprep.mubr.f32.mxu0 0.0
  %141 = vmatmul.mubr.f32.gmra.mrb[0].mxu0 %v65
  %v142 = vpop.f32.mrb[0].mxu0
  %v143 = vadd.f32 %v60, %v142
  %v144 = vpop.f32.mrb[0].mxu0
  %145 = vdwg.mxu0
  %v146 = vtanh.pop %v138
  %v147 = vtanh.pop %v143
  %149 = vset.pattern.permute.xlu0 10
  %150 = vperm.xlu0 %149, %v19
  %v151 = vpop.permute.xlu0 %150
  %154 = vset.pattern.permute.xlu0 10
  %155 = vperm.xlu0 %154, %v20
  %v156 = vpop.permute.xlu0 %155
  %159 = vset.pattern.permute.xlu0 10
  %160 = vperm.xlu0 %159, %v21
  %v161 = vpop.permute.xlu0 %160
  %v163 = vsel %vm62, %v19, 0
  %v165 = vsel %vm62, %v20, 0
  %v167 = vsel %vm62, %v21, 0
  %v170 = vsel %vm67, %v147, 0
  %172 = vmatprep.subr.mxu0 0.0
  %173 = vmatpush1.msra.mxu0 %v146
  %174 = vmatprep.subr.mxu0 0.0
  %175 = vmatpush1.msra.mxu0 %v170
  %176 = vmatprep.subr.mxu0 0.0
  %177 = vmatpush1.msra.mxu0 0.0
  %178 = vmatprep.subr.mxu0 0.0
  %179 = vmatpush1.msra.mxu0 0.0
  %180 = vmatprep.subr.mxu0 0.0
  %181 = vmatpush1.msra.mxu0 0.0
  %182 = vmatprep.subr.mxu0 0.0
  %183 = vmatpush1.msra.mxu0 0.0
  %184 = vmatprep.subr.mxu0 0.0
  %185 = vmatpush1.msra.mxu0 0.0
  %186 = vmatprep.subr.mxu0 0.0
  %187 = vmatpush1.msra.mxu0 0.0
  %188 = vmatprep.subr.mxu0 0.0
  %189 = vmatpush1.msra.mxu0 0.0
  %190 = vmatprep.subr.mxu0 0.0
  %191 = vmatpush1.msra.mxu0 0.0
  %192 = vmatprep.subr.mxu0 0.0
  %193 = vmatpush1.msra.mxu0 0.0
  %194 = vmatprep.subr.mxu0 0.0
  %195 = vmatpush1.msra.mxu0 0.0
  %196 = vmatprep.subr.mxu0 0.0
  %197 = vmatpush1.msra.mxu0 0.0
  %198 = vmatprep.subr.mxu0 0.0
  %199 = vmatpush1.msra.mxu0 0.0
  %200 = vmatprep.subr.mxu0 0.0
  %201 = vmatpush1.msra.mxu0 0.0
  %202 = vmatprep.subr.mxu0 0.0
  %203 = vmatpush1.msra.mxu0 0.0
  %204 = vmatprep.subr.mxu0 0.0
  %205 = vmatpush1.msra.mxu0 0.0
  %206 = vmatprep.subr.mxu0 0.0
  %207 = vmatpush1.msra.mxu0 0.0
  %208 = vmatprep.subr.mxu0 0.0
  %209 = vmatpush1.msra.mxu0 0.0
  %210 = vmatprep.subr.mxu0 0.0
  %211 = vmatpush1.msra.mxu0 0.0
  %212 = vmatprep.subr.mxu0 0.0
  %213 = vmatpush1.msra.mxu0 0.0
  %214 = vmatprep.subr.mxu0 0.0
  %215 = vmatpush1.msra.mxu0 0.0
  %216 = vmatprep.subr.mxu0 0.0
  %217 = vmatpush1.msra.mxu0 0.0
  %218 = vmatprep.subr.mxu0 0.0
  %219 = vmatpush1.msra.mxu0 0.0
  %220 = vmatprep.subr.mxu0 0.0
  %221 = vmatpush1.msra.mxu0 0.0
  %222 = vmatprep.subr.mxu0 0.0
  %223 = vmatpush1.msra.mxu0 0.0
  %224 = vmatprep.subr.mxu0 0.0
  %225 = vmatpush1.msra.mxu0 0.0
  %226 = vmatprep.subr.mxu0 0.0
  %227 = vmatpush1.msra.mxu0 0.0
  %228 = vmatprep.subr.mxu0 0.0
  %229 = vmatpush1.msra.mxu0 0.0
  %230 = vmatprep.subr.mxu0 0.0
  %231 = vmatpush1.msra.mxu0 0.0
  %232 = vmatprep.subr.mxu0 0.0
  %233 = vmatpush1.msra.mxu0 0.0
  %234 = vmatprep.subr.mxu0 0.0
  %235 = vmatpush1.msra.mxu0 0.0
  %236 = vmatprep.mubr.f32.mxu0 0.0
  %237 = vmatmul.mubr.f32.gmra.mrb[0].mxu0 %v163
  %v238 = vpop.f32.mrb[0].mxu0
  %v239 = vadd.f32 %v151, %v238
  %v240 = vpop.f32.mrb[0].mxu0
  %241 = vmatprep.mubr.f32.mxu0 0.0
  %242 = vmatmul.mubr.f32.gmra.mrb[0].mxu0 %v165
  %v243 = vpop.f32.mrb[0].mxu0
  %v244 = vadd.f32 %v156, %v243
  %v245 = vpop.f32.mrb[0].mxu0
  %246 = vmatprep.mubr.f32.mxu0 0.0
  %247 = vmatmul.mubr.f32.gmra.mrb[0].mxu0 %v167
  %v248 = vpop.f32.mrb[0].mxu0
  %v249 = vadd.f32 %v161, %v248
  %v250 = vpop.f32.mrb[0].mxu0
  %251 = vdwg.mxu0
  %v252 = vxor.u32 %v249, 2147483648
  %v253 = vmul.f32 %v252, 1.442695
  %v254 = vpow.pop %v253
  %v255 = vadd.f32 %v254, 1.0
  %v256 = vrcp.pop %v255
  %v257 = vmul.f32 1.0, %v256
  %258 = vst [vmem:[%s2 - $0x4] sm:$0x10] %v257
  %259 = vxpose.xlu0.b32.start [1/16] %v239, 128
  %260 = vxpose.xlu0.b32.cont [2/16] %v244, 128
  %261 = vxpose.xlu0.b32.cont [3/16] %v249, 128
  %262 = vxpose.xlu0.b32.cont [4/16] 0.0, 128
  %263 = vxpose.xlu0.b32.cont [5/16] 0.0, 128
  %264 = vxpose.xlu0.b32.cont [6/16] 0.0, 128
  %265 = vxpose.xlu0.b32.cont [7/16] 0.0, 128
  %266 = vxpose.xlu0.b32.cont [8/16] 0.0, 128
  %267 = vxpose.xlu0.b32.cont [9/16] 0.0, 128
  %268 = vxpose.xlu0.b32.cont [10/16] 0.0, 128
  %269 = vxpose.xlu0.b32.cont [11/16] 0.0, 128
  %270 = vxpose.xlu0.b32.cont [12/16] 0.0, 128
  %271 = vxpose.xlu0.b32.cont [13/16] 0.0, 128
  %272 = vxpose.xlu0.b32.cont [14/16] 0.0, 128
  %273 = vxpose.xlu0.b32.cont [15/16] 0.0, 128
  %274 = vxpose.xlu0.b32.end [16/16] 0.0, 128
  %v275 = vpop.trf.xlu0
  %v276 = vpop.trf.xlu0
  %v277 = vpop.trf.xlu0
  %v278 = vpop.trf.xlu0
  %v279 = vpop.trf.xlu0
  %v280 = vpop.trf.xlu0
  %v281 = vpop.trf.xlu0
  %v282 = vpop.trf.xlu0
  %v283 = vpop.trf.xlu0
  %v284 = vpop.trf.xlu0
  %v285 = vpop.trf.xlu0
  %v286 = vpop.trf.xlu0
  %v287 = vpop.trf.xlu0
  %v288 = vpop.trf.xlu0
  %v289 = vpop.trf.xlu0
  %v290 = vpop.trf.xlu0
  %291 = vst.msk [vmem:[%s3] sm:$0xff] %vm62, %v275
  %292 = vst.msk [vmem:[%s3 + $0x8] sm:$0xff] %vm62, %v276
  %293 = vst.msk [vmem:[%s3 + $0x10] sm:$0xff] %vm62, %v277
  %294 = vst.msk [vmem:[%s3 + $0x18] sm:$0xff] %vm62, %v278
  %295 = vst.msk [vmem:[%s3 + $0x20] sm:$0xff] %vm62, %v279
  %296 = vst.msk [vmem:[%s3 + $0x28] sm:$0xff] %vm62, %v280
  %297 = vst.msk [vmem:[%s3 + $0x30] sm:$0xff] %vm62, %v281
  %298 = vst.msk [vmem:[%s3 + $0x38] sm:$0xff] %vm62, %v282
  %299 = vst.msk [vmem:[%s3 + $0x40] sm:$0xff] %vm62, %v283
  %300 = vst.msk [vmem:[%s3 + $0x48] sm:$0xff] %vm62, %v284
  %301 = vst.msk [vmem:[%s3 + $0x50] sm:$0xff] %vm62, %v285
  %302 = vst.msk [vmem:[%s3 + $0x58] sm:$0xff] %vm62, %v286
  %303 = vst.msk [vmem:[%s3 + $0x60] sm:$0xff] %vm62, %v287
  %304 = vst.msk [vmem:[%s3 + $0x68] sm:$0xff] %vm62, %v288
  %305 = vst.msk [vmem:[%s3 + $0x70] sm:$0xff] %vm62, %v289
  %306 = vst.msk [vmem:[%s3 + $0x78] sm:$0xff] %vm62, %v290
  %323 = vrot.lane.b32.xlu0 %v275, 118
  %v324 = vpop.permute.xlu0 %323
  %325 = vrot.lane.b32.xlu0 %v276, 118
  %v326 = vpop.permute.xlu0 %325
  %327 = vrot.lane.b32.xlu0 %v277, 118
  %v328 = vpop.permute.xlu0 %327
  %329 = vrot.lane.b32.xlu0 %v278, 118
  %v330 = vpop.permute.xlu0 %329
  %331 = vrot.lane.b32.xlu0 %v279, 118
  %v332 = vpop.permute.xlu0 %331
  %333 = vrot.lane.b32.xlu0 %v280, 118
  %v334 = vpop.permute.xlu0 %333
  %335 = vrot.lane.b32.xlu0 %v281, 118
  %v336 = vpop.permute.xlu0 %335
  %337 = vrot.lane.b32.xlu0 %v282, 118
  %v338 = vpop.permute.xlu0 %337
  %339 = vrot.lane.b32.xlu0 %v283, 118
  %v340 = vpop.permute.xlu0 %339
  %341 = vrot.lane.b32.xlu0 %v284, 118
  %v342 = vpop.permute.xlu0 %341
  %343 = vrot.lane.b32.xlu0 %v285, 118
  %v344 = vpop.permute.xlu0 %343
  %345 = vrot.lane.b32.xlu0 %v286, 118
  %v346 = vpop.permute.xlu0 %345
  %347 = vrot.lane.b32.xlu0 %v287, 118
  %v348 = vpop.permute.xlu0 %347
  %349 = vrot.lane.b32.xlu0 %v288, 118
  %v350 = vpop.permute.xlu0 %349
  %351 = vrot.lane.b32.xlu0 %v289, 118
  %v352 = vpop.permute.xlu0 %351
  %353 = vrot.lane.b32.xlu0 %v290, 118
  %v354 = vpop.permute.xlu0 %353
  %371 = vst.msk [vmem:[%s4] sm:$0xff] %vm62, %v324
  %372 = vst.msk [vmem:[%s4 + $0x8] sm:$0xff] %vm62, %v326
  %373 = vst.msk [vmem:[%s4 + $0x10] sm:$0xff] %vm62, %v328
  %374 = vst.msk [vmem:[%s4 + $0x18] sm:$0xff] %vm62, %v330
  %375 = vst.msk [vmem:[%s4 + $0x20] sm:$0xff] %vm62, %v332
  %376 = vst.msk [vmem:[%s4 + $0x28] sm:$0xff] %vm62, %v334
  %377 = vst.msk [vmem:[%s4 + $0x30] sm:$0xff] %vm62, %v336
  %378 = vst.msk [vmem:[%s4 + $0x38] sm:$0xff] %vm62, %v338
  %379 = vst.msk [vmem:[%s4 + $0x40] sm:$0xff] %vm62, %v340
  %380 = vst.msk [vmem:[%s4 + $0x48] sm:$0xff] %vm62, %v342
  %381 = vst.msk [vmem:[%s4 + $0x50] sm:$0xff] %vm62, %v344
  %382 = vst.msk [vmem:[%s4 + $0x58] sm:$0xff] %vm62, %v346
  %383 = vst.msk [vmem:[%s4 + $0x60] sm:$0xff] %vm62, %v348
  %384 = vst.msk [vmem:[%s4 + $0x68] sm:$0xff] %vm62, %v350
  %385 = vst.msk [vmem:[%s4 + $0x70] sm:$0xff] %vm62, %v352
  %386 = vst.msk [vmem:[%s4 + $0x78] sm:$0xff] %vm62, %v354
  // Predicated region
  $region10: #{d_gaussian_forward.1} parent=0 // pred_check
    _
  $region11: #{d_gaussian_forward.1} parent=0 // pred_check_branch
    %388 = sbr.rel (0) target = $region13
  $region12: #{d_gaussian_forward.1} parent=0 // pred_region
    _
  $region13: #{d_gaussian_forward.1} parent=0 // pred_fallthru
    _
  // Predicated region
  $region14: #{d_gaussian_forward.1} parent=0 // pred_check
    _
  $region15: #{d_gaussian_forward.1} parent=0 // pred_check_branch
    %390 = sbr.rel (0) target = $region17
  $region16: #{d_gaussian_forward.1} parent=0 // pred_region
    _
  $region17: #{d_gaussian_forward.1} parent=0 // pred_fallthru
    _
  // Predicated region
  $region18: #{d_gaussian_forward.1} parent=0 // pred_check
    _
  $region19: #{d_gaussian_forward.1} parent=0 // pred_check_branch
    %392 = sbr.rel (0) target = $region21
  $region20: #{d_gaussian_forward.1} parent=0 // pred_region
    _
  $region21: #{d_gaussian_forward.1} parent=0 // pred_fallthru
    _
  // Predicated region
  $region22: #{d_gaussian_forward.1} parent=0 // pred_check
    _
  $region23: #{d_gaussian_forward.1} parent=0 // pred_check_branch
    %394 = sbr.rel (0) target = $region25
  $region24: #{d_gaussian_forward.1} parent=0 // pred_region
    _
  $region25: #{d_gaussian_forward.1} parent=0 // pred_fallthru
    _
  // Predicated region
  $region26: #{d_gaussian_forward.1} parent=0 // pred_check
    _
  $region27: #{d_gaussian_forward.1} parent=0 // pred_check_branch
    %396 = sbr.rel (0) target = $region29
  $region28: #{d_gaussian_forward.1} parent=0 // pred_region
    _
  $region29: #{d_gaussian_forward.1} parent=0 // pred_fallthru
    _
  // Predicated region
  $region30: #{d_gaussian_forward.1} parent=0 // pred_check
    _
  $region31: #{d_gaussian_forward.1} parent=0 // pred_check_branch
    %398 = sbr.rel (0) target = $region33
  $region32: #{d_gaussian_forward.1} parent=0 // pred_region
    _
  $region33: #{d_gaussian_forward.1} parent=0 // pred_fallthru
    _

</llo_original>
